<compile_context>
chip_gen: v7x
topology: tpu7x:2x2x1
jax: 0.10.0
libtpu: 0.0.40
codegen_flags: <defaults>
</compile_context>

<pallas_src>
import jax
import jax.numpy as jnp
from jax.experimental import pallas as pl
from jax.experimental.pallas import tpu as pltpu

# ----- model configuration (consistent with the module) -----
IN   = 16          # dims[0]
HID  = 32          # dims[1]
OUT  = 8           # dims[2]
CTX  = 2           # n_context
TB_MAX = 1024      # max batch rows per grid step (sweep 512-2048 if desired)


def relunet_kernel(x_ref, c_ref, w0x_ref, w0c_ref, w1_ref, hid_ref, out_ref):
    """hid = relu(x @ W0x^T + ctx @ W0c^T); out = hid @ W1^T."""
    x = x_ref[...]                                        # [TB, IN]  f32
    c = c_ref[...]                                        # [TB, CTX] f32

    # Main contraction (K=IN=16) on the MXU, f32 accumulation.
    hid = jnp.dot(x, w0x_ref[...], preferred_element_type=jnp.float32)

    # Context contribution as CTX rank-1 updates on the VPU (free under the
    # DMA slack; avoids pushing a 2-wide operand through the MXU).
    for j in range(CTX):
        hid = hid + c[:, j:j + 1] * w0c_ref[j:j + 1, :]

    hid = jnp.maximum(hid, 0.0)                           # ReLU (f32 VPU)
    hid_ref[...] = hid                                    # [TB, HID] store

    out_ref[...] = jnp.dot(hid, w1_ref[...],
                           preferred_element_type=jnp.float32)  # [TB, OUT]


def prepare_params(w0, w1):
    """One-time (per weight update) prep: split W0 column-wise and transpose.

    w0: [HID, CTX+IN]  (PyTorch Linear layout; context columns come first,
                        because forward does cat((context, x), dim=1))
    w1: [OUT, HID]
    """
    w0 = jnp.asarray(w0, jnp.float32)
    w1 = jnp.asarray(w1, jnp.float32)
    w0c_t = w0[:, :CTX].T      # [CTX, HID]
    w0x_t = w0[:, CTX:].T      # [IN,  HID]
    w1_t = w1.T                # [HID, OUT]
    return w0x_t, w0c_t, w1_t


@jax.jit
def relunet_forward(x, context, params):
    """Matches ReluNNet.forward: returns (out, [x, hid, out], None)."""
    w0x_t, w0c_t, w1_t = params
    b = x.shape[0]

    if b <= TB_MAX:
        # Single block covering the whole (possibly non-8-multiple) batch;
        # block shape == full array shape is always legal.
        tb, n_blocks = b, 1
    else:
        # Large batches: big tiles (multiple of 8 rows), >= 2 parallel blocks.
        tb, n_blocks = TB_MAX, pl.cdiv(b, TB_MAX)

    hid, out = pl.pallas_call(
        relunet_kernel,
        out_shape=(jax.ShapeDtypeStruct((b, HID), jnp.float32),
                   jax.ShapeDtypeStruct((b, OUT), jnp.float32)),
        grid=(n_blocks,),
        in_specs=[
            pl.BlockSpec((tb, IN),   lambda i: (i, 0)),   # x tile
            pl.BlockSpec((tb, CTX),  lambda i: (i, 0)),   # context tile
            pl.BlockSpec((IN, HID),  lambda i: (0, 0)),   # W0x^T (resident)
            pl.BlockSpec((CTX, HID), lambda i: (0, 0)),   # W0c^T (resident)
            pl.BlockSpec((HID, OUT), lambda i: (0, 0)),   # W1^T  (resident)
        ],
        out_specs=(pl.BlockSpec((tb, HID), lambda i: (i, 0)),   # hid
                   pl.BlockSpec((tb, OUT), lambda i: (i, 0))),  # out
        compiler_params=pltpu.CompilerParams(
            dimension_semantics=("parallel",),            # shard batch across TCs
        ),
    )(x, context, w0x_t, w0c_t, w1_t)

    acts = [x, hid, out]   # [input, relu hidden, final output]
    return out, acts, None


def relunet_reference(x, context, w0, w1):
    """Pure-JAX reference of the PyTorch forward (f32 throughout)."""
    xc = jnp.concatenate([context, x], axis=1)
    hid = jnp.maximum(jnp.dot(xc, w0.T), 0.0)
    out = jnp.dot(hid, w1.T)
    return out, [x, hid, out], None


if __name__ == "__main__":
    key = jax.random.PRNGKey(0)
    kx, kc, k0, k1 = jax.random.split(key, 4)

    # Small primary example batch.
    B = 64
    x = jax.random.normal(kx, (B, IN), dtype=jnp.float32)
    context = jax.random.normal(kc, (B, CTX), dtype=jnp.float32)

    # Deterministic weights, PyTorch Linear default-style uniform init (no bias).
    bound0 = (IN + CTX) ** -0.5
    bound1 = HID ** -0.5
    w0 = jax.random.uniform(k0, (HID, IN + CTX), jnp.float32, -bound0, bound0)
    w1 = jax.random.uniform(k1, (OUT, HID), jnp.float32, -bound1, bound1)

    params = prepare_params(w0, w1)   # split/transposes hoisted out of forward

    out, acts, _ = relunet_forward(x, context, params)
    jax.block_until_ready(out)
    jax.block_until_ready(acts[1])

    # Tolerances cover MXU-pass rounding differences vs. the XLA f32 reference;
    # any structural bug (wrong split/transpose, missing ReLU) would be O(0.1-1).
    ref_out, ref_acts, _ = relunet_reference(x, context, w0, w1)
    assert jnp.allclose(acts[1], ref_acts[1], atol=2e-2, rtol=2e-2)
    assert jnp.allclose(out, ref_out, atol=2e-2, rtol=2e-2)

    # Tiny non-8-multiple batch: single full-array block (grid=(1,)).
    xs, cs = x[:5], context[:5]
    out_s, acts_s, _ = relunet_forward(xs, cs, params)
    jax.block_until_ready(out_s)
    ref_s = relunet_reference(xs, cs, w0, w1)
    assert jnp.allclose(out_s, ref_s[0], atol=2e-2, rtol=2e-2)
    assert jnp.allclose(acts_s[1], ref_s[1][1], atol=2e-2, rtol=2e-2)

    # Large batch: multi-block parallel grid with a ragged (masked) last block.
    BL = 2304   # = 2*TB_MAX + 256 -> 3 grid blocks, last one partially valid
    kx2, kc2 = jax.random.split(jax.random.PRNGKey(1))
    xl = jax.random.normal(kx2, (BL, IN), dtype=jnp.float32)
    cl = jax.random.normal(kc2, (BL, CTX), dtype=jnp.float32)
    out_l, acts_l, _ = relunet_forward(xl, cl, params)
    jax.block_until_ready(out_l)
    ref_l = relunet_reference(xl, cl, w0, w1)
    assert jnp.allclose(out_l, ref_l[0], atol=2e-2, rtol=2e-2)
    assert jnp.allclose(acts_l[1], ref_l[1][1], atol=2e-2, rtol=2e-2)

    print("KERNEL_OK")
</pallas_src>

<mosaic_0001>
module attributes {stable_mosaic.version = 11 : i64} {
  func.func @relunet_kernel(%arg0: i32, %arg1: memref<64x16xf32, #tpu.memory_space<vmem>>, %arg2: memref<64x2xf32, #tpu.memory_space<vmem>>, %arg3: memref<16x32xf32, #tpu.memory_space<vmem>>, %arg4: memref<2x32xf32, #tpu.memory_space<vmem>>, %arg5: memref<32x8xf32, #tpu.memory_space<vmem>>, %arg6: memref<64x32xf32, #tpu.memory_space<vmem>>, %arg7: memref<64x8xf32, #tpu.memory_space<vmem>>) attributes {dimension_semantics = [#tpu.dimension_semantics<parallel>], iteration_bounds = array<i64: 1>, scalar_prefetch = 0 : i64, scratch_operands = 0 : i64, tpu.core_type = #tpu.core_type<tc>, window_params = [{transform_indices = @transform_0, window_bounds = array<i64: 64, 16>}, {transform_indices = @transform_1, window_bounds = array<i64: 64, 2>}, {pipeline_mode = #tpu.pipeline_mode<synchronous>, transform_indices = @transform_2, window_bounds = array<i64: 16, 32>}, {pipeline_mode = #tpu.pipeline_mode<synchronous>, transform_indices = @transform_3, window_bounds = array<i64: 2, 32>}, {pipeline_mode = #tpu.pipeline_mode<synchronous>, transform_indices = @transform_4, window_bounds = array<i64: 32, 8>}, {transform_indices = @transform_5, window_bounds = array<i64: 64, 32>}, {transform_indices = @transform_6, window_bounds = array<i64: 64, 8>}]} {
    %c0 = arith.constant 0 : index
    %c0_0 = arith.constant 0 : index
    %0 = vector.load %arg1[%c0, %c0_0] : memref<64x16xf32, #tpu.memory_space<vmem>>, vector<64x16xf32>
    %c0_1 = arith.constant 0 : index
    %c0_2 = arith.constant 0 : index
    %1 = vector.load %arg2[%c0_1, %c0_2] : memref<64x2xf32, #tpu.memory_space<vmem>>, vector<64x2xf32>
    %c0_3 = arith.constant 0 : index
    %c0_4 = arith.constant 0 : index
    %2 = vector.load %arg3[%c0_3, %c0_4] : memref<16x32xf32, #tpu.memory_space<vmem>>, vector<16x32xf32>
    %cst = arith.constant dense<0.000000e+00> : vector<64x32xf32>
    %3 = tpu.matmul %0, %2, %cst {dimension_numbers = #tpu.dot_dimension_numbers<[1], [0], [0], [1], [0, 0, 1, 1], [], []>} : vector<64x16xf32>, vector<16x32xf32>, vector<64x32xf32> -> vector<64x32xf32>
    %4 = vector.extract_strided_slice %1 {offsets = [0, 0], sizes = [64, 1], strides = [1, 1]} : vector<64x2xf32> to vector<64x1xf32>
    %c0_5 = arith.constant 0 : index
    %c0_6 = arith.constant 0 : index
    %5 = vector.load %arg4[%c0_5, %c0_6] : memref<2x32xf32, #tpu.memory_space<vmem>>, vector<1x32xf32>
    %6 = vector.broadcast %4 : vector<64x1xf32> to vector<64x32xf32>
    %7 = vector.broadcast %5 : vector<1x32xf32> to vector<64x32xf32>
    %8 = arith.mulf %6, %7 : vector<64x32xf32>
    %9 = arith.addf %3, %8 : vector<64x32xf32>
    %10 = vector.extract_strided_slice %1 {offsets = [0, 1], sizes = [64, 1], strides = [1, 1]} : vector<64x2xf32> to vector<64x1xf32>
    %c1 = arith.constant 1 : index
    %c0_7 = arith.constant 0 : index
    %11 = vector.load %arg4[%c1, %c0_7] : memref<2x32xf32, #tpu.memory_space<vmem>>, vector<1x32xf32>
    %12 = vector.broadcast %10 : vector<64x1xf32> to vector<64x32xf32>
    %13 = vector.broadcast %11 : vector<1x32xf32> to vector<64x32xf32>
    %14 = arith.mulf %12, %13 : vector<64x32xf32>
    %15 = arith.addf %9, %14 : vector<64x32xf32>
    %cst_8 = arith.constant 0.000000e+00 : f32
    %16 = vector.broadcast %cst_8 : f32 to vector<64x32xf32>
    %17 = arith.maximumf %15, %16 : vector<64x32xf32>
    %c0_9 = arith.constant 0 : index
    %c0_10 = arith.constant 0 : index
    %18 = vector.load %arg6[%c0_9, %c0_10] : memref<64x32xf32, #tpu.memory_space<vmem>>, vector<64x32xf32>
    tpu.vector_store %arg6[%c0_9, %c0_10], %17 {strides = array<i32>} : memref<64x32xf32, #tpu.memory_space<vmem>>, vector<64x32xf32>,
    %c0_11 = arith.constant 0 : index
    %c0_12 = arith.constant 0 : index
    %19 = vector.load %arg5[%c0_11, %c0_12] : memref<32x8xf32, #tpu.memory_space<vmem>>, vector<32x8xf32>
    %cst_13 = arith.constant dense<0.000000e+00> : vector<64x8xf32>
    %20 = tpu.matmul %17, %19, %cst_13 {dimension_numbers = #tpu.dot_dimension_numbers<[1], [0], [0], [1], [0, 0, 1, 1], [], []>} : vector<64x32xf32>, vector<32x8xf32>, vector<64x8xf32> -> vector<64x8xf32>
    %c0_14 = arith.constant 0 : index
    %c0_15 = arith.constant 0 : index
    %21 = vector.load %arg7[%c0_14, %c0_15] : memref<64x8xf32, #tpu.memory_space<vmem>>, vector<64x8xf32>
    tpu.vector_store %arg7[%c0_14, %c0_15], %20 {strides = array<i32>} : memref<64x8xf32, #tpu.memory_space<vmem>>, vector<64x8xf32>,
    return
  }
  func.func @transform_0(%arg0: i32) -> (i32, i32) {
    %c0_i32 = arith.constant 0 : i32
    %c0_i32_0 = arith.constant 0 : i32
    return %arg0, %c0_i32 : i32, i32
  }
  func.func @transform_1(%arg0: i32) -> (i32, i32) {
    %c0_i32 = arith.constant 0 : i32
    %c0_i32_0 = arith.constant 0 : i32
    return %arg0, %c0_i32 : i32, i32
  }
  func.func @transform_2(%arg0: i32) -> (i32, i32) {
    %c0_i32 = arith.constant 0 : i32
    %c0_i32_0 = arith.constant 0 : i32
    %c0_i32_1 = arith.constant 0 : i32
    return %c0_i32, %c0_i32_0 : i32, i32
  }
  func.func @transform_3(%arg0: i32) -> (i32, i32) {
    %c0_i32 = arith.constant 0 : i32
    %c0_i32_0 = arith.constant 0 : i32
    %c0_i32_1 = arith.constant 0 : i32
    return %c0_i32, %c0_i32_0 : i32, i32
  }
  func.func @transform_4(%arg0: i32) -> (i32, i32) {
    %c0_i32 = arith.constant 0 : i32
    %c0_i32_0 = arith.constant 0 : i32
    %c0_i32_1 = arith.constant 0 : i32
    return %c0_i32, %c0_i32_0 : i32, i32
  }
  func.func @transform_5(%arg0: i32) -> (i32, i32) {
    %c0_i32 = arith.constant 0 : i32
    %c0_i32_0 = arith.constant 0 : i32
    return %arg0, %c0_i32 : i32, i32
  }
  func.func @transform_6(%arg0: i32) -> (i32, i32) {
    %c0_i32 = arith.constant 0 : i32
    %c0_i32_0 = arith.constant 0 : i32
    return %arg0, %c0_i32 : i32, i32
  }
}

</mosaic_0001>

<llo_original>
// kernel: relunet_forward.1
$region0: #{relunet_forward.1}
  #allocation0 [shape = 'u32[]', space=smem, size = 0x4, offset = 0x4, fixed_abs, tag = 'smem constant byte address 0x4 - core index']
  #allocation1 [shape = 'u32[144,128]{1,0:T(1,128)}', space=vmem, size = 0x12000, scoped, tag = 'internal scratch']
  %s0 = inlined_call_operand.vmem [shape: f32[64,16], index: 0, kind: input, shape index: {}]
  %s1 = inlined_call_operand.vmem [shape: f32[64,2], index: 1, kind: input, shape index: {}]
  %s2 = inlined_call_operand.vmem [shape: f32[16,32], index: 2, kind: input, shape index: {}]
  %s3 = inlined_call_operand.vmem [shape: f32[2,32], index: 3, kind: input, shape index: {}]
  %s4 = inlined_call_operand.vmem [shape: f32[32,8], index: 4, kind: input, shape index: {}]
  %s5 = inlined_call_operand.vmem [shape: f32[64,32], index: 5, kind: output, shape index: {0}]
  %s6 = inlined_call_operand.vmem [shape: f32[64,8], index: 6, kind: output, shape index: {1}]
  %7 = xla_tuple %s5, %s6
  %s8 = sld [smem:[#allocation0]]
  $region38: #{relunet_forward.1} parent=0
    _
  %s10 = ssub.s32 1, %s8
  %s11 = scalar_select 0, %s10, %s8
  // Predicated region
  $region2: #{relunet_forward.1} parent=0 // pred_check
    _
  $region3: #{relunet_forward.1} parent=0 // pred_check_branch
    %13 = sbr.rel (0) target = $region5
  $region4: #{relunet_forward.1} parent=0 // pred_region
    _
  $region5: #{relunet_forward.1} parent=0 // pred_fallthru
    _
  // Predicated region
  $region6: #{relunet_forward.1} parent=0 // pred_check
    _
  $region7: #{relunet_forward.1} parent=0 // pred_check_branch
    %15 = sbr.rel (0) target = $region9
  $region8: #{relunet_forward.1} parent=0 // pred_region
    _
  $region9: #{relunet_forward.1} parent=0 // pred_fallthru
    _
  // Predicated region
  $region10: #{relunet_forward.1} parent=0 // pred_check
    _
  $region11: #{relunet_forward.1} parent=0 // pred_check_branch
    %17 = sbr.rel (0) target = $region13
  $region12: #{relunet_forward.1} parent=0 // pred_region
    _
  $region13: #{relunet_forward.1} parent=0 // pred_fallthru
    _
  // Predicated region
  $region14: #{relunet_forward.1} parent=0 // pred_check
    _
  $region15: #{relunet_forward.1} parent=0 // pred_check_branch
    %19 = sbr.rel (0) target = $region17
  $region16: #{relunet_forward.1} parent=0 // pred_region
    _
  $region17: #{relunet_forward.1} parent=0 // pred_fallthru
    _
  // Predicated region
  $region18: #{relunet_forward.1} parent=0 // pred_check
    _
  $region19: #{relunet_forward.1} parent=0 // pred_check_branch
    %21 = sbr.rel (0) target = $region21
  $region20: #{relunet_forward.1} parent=0 // pred_region
    _
  $region21: #{relunet_forward.1} parent=0 // pred_fallthru
    _
  %v22 = vld [vmem:[%s0] sm:$0xff]
  %v23 = vld [vmem:[%s0 + $0x8] sm:$0xff]
  %v24 = vld [vmem:[%s0 + $0x10] sm:$0xff]
  %v25 = vld [vmem:[%s0 + $0x18] sm:$0xff]
  %v26 = vld [vmem:[%s0 + $0x20] sm:$0xff]
  %v27 = vld [vmem:[%s0 + $0x28] sm:$0xff]
  %v28 = vld [vmem:[%s0 + $0x30] sm:$0xff]
  %v29 = vld [vmem:[%s0 + $0x38] sm:$0xff]
  %v30 = vld [vmem:[%s1] sm:$0xff]
  %v31 = vld [vmem:[%s1 + $0x8] sm:$0xff]
  %v32 = vld [vmem:[%s1 + $0x10] sm:$0xff]
  %v33 = vld [vmem:[%s1 + $0x18] sm:$0xff]
  %v34 = vld [vmem:[%s1 + $0x20] sm:$0xff]
  %v35 = vld [vmem:[%s1 + $0x28] sm:$0xff]
  %v36 = vld [vmem:[%s1 + $0x30] sm:$0xff]
  %v37 = vld [vmem:[%s1 + $0x38] sm:$0xff]
  %v38 = vld [vmem:[%s2] sm:$0xff]
  %v39 = vld [vmem:[%s2 + $0x8] sm:$0xff]
  %v40 = vld [vmem:[%s3] sm:$0x1]
  %42 = vset.pattern.permute.xlu0 0
  %43 = vperm.xlu0 %42, %v30
  %v44 = vpop.permute.xlu0 %43
  %47 = vset.pattern.permute.xlu0 0
  %48 = vperm.xlu0 %47, %v31
  %v49 = vpop.permute.xlu0 %48
  %52 = vset.pattern.permute.xlu0 0
  %53 = vperm.xlu0 %52, %v32
  %v54 = vpop.permute.xlu0 %53
  %57 = vset.pattern.permute.xlu0 0
  %58 = vperm.xlu0 %57, %v33
  %v59 = vpop.permute.xlu0 %58
  %62 = vset.pattern.permute.xlu0 0
  %63 = vperm.xlu0 %62, %v34
  %v64 = vpop.permute.xlu0 %63
  %67 = vset.pattern.permute.xlu0 0
  %68 = vperm.xlu0 %67, %v35
  %v69 = vpop.permute.xlu0 %68
  %72 = vset.pattern.permute.xlu0 0
  %73 = vperm.xlu0 %72, %v36
  %v74 = vpop.permute.xlu0 %73
  %77 = vset.pattern.permute.xlu0 0
  %78 = vperm.xlu0 %77, %v37
  %v79 = vpop.permute.xlu0 %78
  %v81 = vlaneseq
  %v82 = vshrl.u32 %v81, 7
  %v83 = vsub.s32 0, %v82
  %v84 = vrot.slane %v40, %v83
  %v85 = vmul.f32 %v44, %v84
  %v86 = vmul.f32 %v49, %v84
  %v87 = vmul.f32 %v54, %v84
  %v88 = vmul.f32 %v59, %v84
  %v89 = vmul.f32 %v64, %v84
  %v90 = vmul.f32 %v69, %v84
  %v91 = vmul.f32 %v74, %v84
  %v92 = vmul.f32 %v79, %v84
  %vm93 = vcmask 130048
  %v95 = vsel %vm93, %v22, 0
  %v98 = vsel %vm93, %v23, 0
  %v101 = vsel %vm93, %v24, 0
  %v104 = vsel %vm93, %v25, 0
  %v107 = vsel %vm93, %v26, 0
  %v110 = vsel %vm93, %v27, 0
  %v113 = vsel %vm93, %v28, 0
  %v116 = vsel %vm93, %v29, 0
  %118 = vmatprep.subr.mxu0 0.0
  %119 = vmatpush1.msra.mxu0 %v38
  %120 = vmatprep.subr.mxu0 0.0
  %121 = vmatpush1.msra.mxu0 %v39
  %122 = vmatprep.subr.mxu0 0.0
  %123 = vmatpush1.msra.mxu0 0.0
  %124 = vmatprep.subr.mxu0 0.0
  %125 = vmatpush1.msra.mxu0 0.0
  %126 = vmatprep.subr.mxu0 0.0
  %127 = vmatpush1.msra.mxu0 0.0
  %128 = vmatprep.subr.mxu0 0.0
  %129 = vmatpush1.msra.mxu0 0.0
  %130 = vmatprep.subr.mxu0 0.0
  %131 = vmatpush1.msra.mxu0 0.0
  %132 = vmatprep.subr.mxu0 0.0
  %133 = vmatpush1.msra.mxu0 0.0
  %134 = vmatprep.subr.mxu0 0.0
  %135 = vmatpush1.msra.mxu0 0.0
  %136 = vmatprep.subr.mxu0 0.0
  %137 = vmatpush1.msra.mxu0 0.0
  %138 = vmatprep.subr.mxu0 0.0
  %139 = vmatpush1.msra.mxu0 0.0
  %140 = vmatprep.subr.mxu0 0.0
  %141 = vmatpush1.msra.mxu0 0.0
  %142 = vmatprep.subr.mxu0 0.0
  %143 = vmatpush1.msra.mxu0 0.0
  %144 = vmatprep.subr.mxu0 0.0
  %145 = vmatpush1.msra.mxu0 0.0
  %146 = vmatprep.subr.mxu0 0.0
  %147 = vmatpush1.msra.mxu0 0.0
  %148 = vmatprep.subr.mxu0 0.0
  %149 = vmatpush1.msra.mxu0 0.0
  %150 = vmatprep.subr.mxu0 0.0
  %151 = vmatpush1.msra.mxu0 0.0
  %152 = vmatprep.subr.mxu0 0.0
  %153 = vmatpush1.msra.mxu0 0.0
  %154 = vmatprep.subr.mxu0 0.0
  %155 = vmatpush1.msra.mxu0 0.0
  %156 = vmatprep.subr.mxu0 0.0
  %157 = vmatpush1.msra.mxu0 0.0
  %158 = vmatprep.subr.mxu0 0.0
  %159 = vmatpush1.msra.mxu0 0.0
  %160 = vmatprep.subr.mxu0 0.0
  %161 = vmatpush1.msra.mxu0 0.0
  %162 = vmatprep.subr.mxu0 0.0
  %163 = vmatpush1.msra.mxu0 0.0
  %164 = vmatprep.subr.mxu0 0.0
  %165 = vmatpush1.msra.mxu0 0.0
  %166 = vmatprep.subr.mxu0 0.0
  %167 = vmatpush1.msra.mxu0 0.0
  %168 = vmatprep.subr.mxu0 0.0
  %169 = vmatpush1.msra.mxu0 0.0
  %170 = vmatprep.subr.mxu0 0.0
  %171 = vmatpush1.msra.mxu0 0.0
  %172 = vmatprep.subr.mxu0 0.0
  %173 = vmatpush1.msra.mxu0 0.0
  %174 = vmatprep.subr.mxu0 0.0
  %175 = vmatpush1.msra.mxu0 0.0
  %176 = vmatprep.subr.mxu0 0.0
  %177 = vmatpush1.msra.mxu0 0.0
  %178 = vmatprep.subr.mxu0 0.0
  %179 = vmatpush1.msra.mxu0 0.0
  %180 = vmatprep.subr.mxu0 0.0
  %181 = vmatpush1.msra.mxu0 0.0
  %182 = vmatprep.mubr.f32.mxu0 0.0
  %183 = vmatmul.mubr.f32.gmra.mrb[0].mxu0 %v95
  %v184 = vpop.f32.mrb[0].mxu0
  %v185 = vadd.f32 %v85, %v184
  %v186 = vpop.f32.mrb[0].mxu0
  %187 = vmatprep.mubr.f32.mxu0 0.0
  %188 = vmatmul.mubr.f32.gmra.mrb[0].mxu0 %v98
  %v189 = vpop.f32.mrb[0].mxu0
  %v190 = vadd.f32 %v86, %v189
  %v191 = vpop.f32.mrb[0].mxu0
  %192 = vmatprep.mubr.f32.mxu0 0.0
  %193 = vmatmul.mubr.f32.gmra.mrb[0].mxu0 %v101
  %v194 = vpop.f32.mrb[0].mxu0
  %v195 = vadd.f32 %v87, %v194
  %v196 = vpop.f32.mrb[0].mxu0
  %197 = vmatprep.mubr.f32.mxu0 0.0
  %198 = vmatmul.mubr.f32.gmra.mrb[0].mxu0 %v104
  %v199 = vpop.f32.mrb[0].mxu0
  %v200 = vadd.f32 %v88, %v199
  %v201 = vpop.f32.mrb[0].mxu0
  %202 = vmatprep.mubr.f32.mxu0 0.0
  %203 = vmatmul.mubr.f32.gmra.mrb[0].mxu0 %v107
  %v204 = vpop.f32.mrb[0].mxu0
  %v205 = vadd.f32 %v89, %v204
  %v206 = vpop.f32.mrb[0].mxu0
  %207 = vmatprep.mubr.f32.mxu0 0.0
  %208 = vmatmul.mubr.f32.gmra.mrb[0].mxu0 %v110
  %v209 = vpop.f32.mrb[0].mxu0
  %v210 = vadd.f32 %v90, %v209
  %v211 = vpop.f32.mrb[0].mxu0
  %212 = vmatprep.mubr.f32.mxu0 0.0
  %213 = vmatmul.mubr.f32.gmra.mrb[0].mxu0 %v113
  %v214 = vpop.f32.mrb[0].mxu0
  %v215 = vadd.f32 %v91, %v214
  %v216 = vpop.f32.mrb[0].mxu0
  %217 = vmatprep.mubr.f32.mxu0 0.0
  %218 = vmatmul.mubr.f32.gmra.mrb[0].mxu0 %v116
  %v219 = vpop.f32.mrb[0].mxu0
  %v220 = vadd.f32 %v92, %v219
  %v221 = vpop.f32.mrb[0].mxu0
  %222 = vdwg.mxu0
  %v223 = vld [vmem:[%s3 + $0x1] sm:$0x1]
  %224 = vset.pattern.permute.xlu0 1
  %225 = vperm.xlu0 %224, %v30
  %v226 = vpop.permute.xlu0 %225
  %228 = vset.pattern.permute.xlu0 1
  %229 = vperm.xlu0 %228, %v31
  %v230 = vpop.permute.xlu0 %229
  %232 = vset.pattern.permute.xlu0 1
  %233 = vperm.xlu0 %232, %v32
  %v234 = vpop.permute.xlu0 %233
  %236 = vset.pattern.permute.xlu0 1
  %237 = vperm.xlu0 %236, %v33
  %v238 = vpop.permute.xlu0 %237
  %240 = vset.pattern.permute.xlu0 1
  %241 = vperm.xlu0 %240, %v34
  %v242 = vpop.permute.xlu0 %241
  %244 = vset.pattern.permute.xlu0 1
  %245 = vperm.xlu0 %244, %v35
  %v246 = vpop.permute.xlu0 %245
  %248 = vset.pattern.permute.xlu0 1
  %249 = vperm.xlu0 %248, %v36
  %v250 = vpop.permute.xlu0 %249
  %252 = vset.pattern.permute.xlu0 1
  %253 = vperm.xlu0 %252, %v37
  %v254 = vpop.permute.xlu0 %253
  %v256 = vlaneseq
  %v257 = vshrl.u32 %v256, 7
  %v258 = vsub.s32 0, %v257
  %v259 = vrot.slane %v223, %v258
  %v260 = vmul.f32 %v226, %v259
  %v261 = vmul.f32 %v230, %v259
  %v262 = vmul.f32 %v234, %v259
  %v263 = vmul.f32 %v238, %v259
  %v264 = vmul.f32 %v242, %v259
  %v265 = vmul.f32 %v246, %v259
  %v266 = vmul.f32 %v250, %v259
  %v267 = vmul.f32 %v254, %v259
  %v268 = vadd.f32 %v185, %v260
  %v269 = vadd.f32 %v190, %v261
  %v270 = vadd.f32 %v195, %v262
  %v271 = vadd.f32 %v200, %v263
  %v272 = vadd.f32 %v205, %v264
  %v273 = vadd.f32 %v210, %v265
  %v274 = vadd.f32 %v215, %v266
  %v275 = vadd.f32 %v220, %v267
  %v276 = vmax.f32 %v268, 0.0
  %v277 = vmax.f32 %v269, 0.0
  %v278 = vmax.f32 %v270, 0.0
  %v279 = vmax.f32 %v271, 0.0
  %v280 = vmax.f32 %v272, 0.0
  %v281 = vmax.f32 %v273, 0.0
  %v282 = vmax.f32 %v274, 0.0
  %v283 = vmax.f32 %v275, 0.0
  %vm284 = vcmask 261120
  %285 = vst.msk [vmem:[%s5] sm:$0xff] %vm284, %v276
  %286 = vst.msk [vmem:[%s5 + $0x8] sm:$0xff] %vm284, %v277
  %287 = vst.msk [vmem:[%s5 + $0x10] sm:$0xff] %vm284, %v278
  %288 = vst.msk [vmem:[%s5 + $0x18] sm:$0xff] %vm284, %v279
  %289 = vst.msk [vmem:[%s5 + $0x20] sm:$0xff] %vm284, %v280
  %290 = vst.msk [vmem:[%s5 + $0x28] sm:$0xff] %vm284, %v281
  %291 = vst.msk [vmem:[%s5 + $0x30] sm:$0xff] %vm284, %v282
  %292 = vst.msk [vmem:[%s5 + $0x38] sm:$0xff] %vm284, %v283
  %v293 = vld [vmem:[%s4] sm:$0xff]
  %v294 = vld [vmem:[%s4 + $0x8] sm:$0xff]
  %v295 = vld [vmem:[%s4 + $0x10] sm:$0xff]
  %v296 = vld [vmem:[%s4 + $0x18] sm:$0xff]
  %v298 = vsel %vm284, %v276, 0
  %v301 = vsel %vm284, %v277, 0
  %v304 = vsel %vm284, %v278, 0
  %v307 = vsel %vm284, %v279, 0
  %v310 = vsel %vm284, %v280, 0
  %v313 = vsel %vm284, %v281, 0
  %v316 = vsel %vm284, %v282, 0
  %v319 = vsel %vm284, %v283, 0
  %321 = vmatprep.subr.mxu0 0.0
  %322 = vmatpush1.msra.mxu0 %v293
  %323 = vmatprep.subr.mxu0 0.0
  %324 = vmatpush1.msra.mxu0 %v294
  %325 = vmatprep.subr.mxu0 0.0
  %326 = vmatpush1.msra.mxu0 %v295
  %327 = vmatprep.subr.mxu0 0.0
  %328 = vmatpush1.msra.mxu0 %v296
  %329 = vmatprep.subr.mxu0 0.0
  %330 = vmatpush1.msra.mxu0 0.0
  %331 = vmatprep.subr.mxu0 0.0
  %332 = vmatpush1.msra.mxu0 0.0
  %333 = vmatprep.subr.mxu0 0.0
  %334 = vmatpush1.msra.mxu0 0.0
  %335 = vmatprep.subr.mxu0 0.0
  %336 = vmatpush1.msra.mxu0 0.0
  %337 = vmatprep.subr.mxu0 0.0
  %338 = vmatpush1.msra.mxu0 0.0
  %339 = vmatprep.subr.mxu0 0.0
  %340 = vmatpush1.msra.mxu0 0.0
  %341 = vmatprep.subr.mxu0 0.0
  %342 = vmatpush1.msra.mxu0 0.0
  %343 = vmatprep.subr.mxu0 0.0
  %344 = vmatpush1.msra.mxu0 0.0
  %345 = vmatprep.subr.mxu0 0.0
  %346 = vmatpush1.msra.mxu0 0.0
  %347 = vmatprep.subr.mxu0 0.0
  %348 = vmatpush1.msra.mxu0 0.0
  %349 = vmatprep.subr.mxu0 0.0
  %350 = vmatpush1.msra.mxu0 0.0
  %351 = vmatprep.subr.mxu0 0.0
  %352 = vmatpush1.msra.mxu0 0.0
  %353 = vmatprep.subr.mxu0 0.0
  %354 = vmatpush1.msra.mxu0 0.0
  %355 = vmatprep.subr.mxu0 0.0
  %356 = vmatpush1.msra.mxu0 0.0
  %357 = vmatprep.subr.mxu0 0.0
  %358 = vmatpush1.msra.mxu0 0.0
  %359 = vmatprep.subr.mxu0 0.0
  %360 = vmatpush1.msra.mxu0 0.0
  %361 = vmatprep.subr.mxu0 0.0
  %362 = vmatpush1.msra.mxu0 0.0
  %363 = vmatprep.subr.mxu0 0.0
  %364 = vmatpush1.msra.mxu0 0.0
  %365 = vmatprep.subr.mxu0 0.0
  %366 = vmatpush1.msra.mxu0 0.0
  %367 = vmatprep.subr.mxu0 0.0
  %368 = vmatpush1.msra.mxu0 0.0
  %369 = vmatprep.subr.mxu0 0.0
  %370 = vmatpush1.msra.mxu0 0.0
  %371 = vmatprep.subr.mxu0 0.0
  %372 = vmatpush1.msra.mxu0 0.0
  %373 = vmatprep.subr.mxu0 0.0
  %374 = vmatpush1.msra.mxu0 0.0
  %375 = vmatprep.subr.mxu0 0.0
  %376 = vmatpush1.msra.mxu0 0.0
  %377 = vmatprep.subr.mxu0 0.0
  %378 = vmatpush1.msra.mxu0 0.0
  %379 = vmatprep.subr.mxu0 0.0
  %380 = vmatpush1.msra.mxu0 0.0
  %381 = vmatprep.subr.mxu0 0.0
  %382 = vmatpush1.msra.mxu0 0.0
  %383 = vmatprep.subr.mxu0 0.0
  %384 = vmatpush1.msra.mxu0 0.0
  %385 = vmatprep.mubr.f32.mxu0 0.0
  %386 = vmatmul.mubr.f32.gmra.mrb[0].mxu0 %v298
  %v387 = vpop.f32.mrb[0].mxu0
  %v388 = vadd.f32 0.0, %v387
  %v389 = vpop.f32.mrb[0].mxu0
  %390 = vmatprep.mubr.f32.mxu0 0.0
  %391 = vmatmul.mubr.f32.gmra.mrb[0].mxu0 %v301
  %v392 = vpop.f32.mrb[0].mxu0
  %v393 = vadd.f32 0.0, %v392
  %v394 = vpop.f32.mrb[0].mxu0
  %395 = vmatprep.mubr.f32.mxu0 0.0
  %396 = vmatmul.mubr.f32.gmra.mrb[0].mxu0 %v304
  %v397 = vpop.f32.mrb[0].mxu0
  %v398 = vadd.f32 0.0, %v397
  %v399 = vpop.f32.mrb[0].mxu0
  %400 = vmatprep.mubr.f32.mxu0 0.0
  %401 = vmatmul.mubr.f32.gmra.mrb[0].mxu0 %v307
  %v402 = vpop.f32.mrb[0].mxu0
  %v403 = vadd.f32 0.0, %v402
  %v404 = vpop.f32.mrb[0].mxu0
  %405 = vmatprep.mubr.f32.mxu0 0.0
  %406 = vmatmul.mubr.f32.gmra.mrb[0].mxu0 %v310
  %v407 = vpop.f32.mrb[0].mxu0
  %v408 = vadd.f32 0.0, %v407
  %v409 = vpop.f32.mrb[0].mxu0
  %410 = vmatprep.mubr.f32.mxu0 0.0
  %411 = vmatmul.mubr.f32.gmra.mrb[0].mxu0 %v313
  %v412 = vpop.f32.mrb[0].mxu0
  %v413 = vadd.f32 0.0, %v412
  %v414 = vpop.f32.mrb[0].mxu0
  %415 = vmatprep.mubr.f32.mxu0 0.0
  %416 = vmatmul.mubr.f32.gmra.mrb[0].mxu0 %v316
  %v417 = vpop.f32.mrb[0].mxu0
  %v418 = vadd.f32 0.0, %v417
  %v419 = vpop.f32.mrb[0].mxu0
  %420 = vmatprep.mubr.f32.mxu0 0.0
  %421 = vmatmul.mubr.f32.gmra.mrb[0].mxu0 %v319
  %v422 = vpop.f32.mrb[0].mxu0
  %v423 = vadd.f32 0.0, %v422
  %v424 = vpop.f32.mrb[0].mxu0
  %425 = vdwg.mxu0
  %vm426 = vcmask 64512
  %427 = vst.msk [vmem:[%s6] sm:$0xff] %vm426, %v388
  %428 = vst.msk [vmem:[%s6 + $0x8] sm:$0xff] %vm426, %v393
  %429 = vst.msk [vmem:[%s6 + $0x10] sm:$0xff] %vm426, %v398
  %430 = vst.msk [vmem:[%s6 + $0x18] sm:$0xff] %vm426, %v403
  %431 = vst.msk [vmem:[%s6 + $0x20] sm:$0xff] %vm426, %v408
  %432 = vst.msk [vmem:[%s6 + $0x28] sm:$0xff] %vm426, %v413
  %433 = vst.msk [vmem:[%s6 + $0x30] sm:$0xff] %vm426, %v418
  %434 = vst.msk [vmem:[%s6 + $0x38] sm:$0xff] %vm426, %v423
  // Predicated region
  $region22: #{relunet_forward.1} parent=0 // pred_check
    _
  $region23: #{relunet_forward.1} parent=0 // pred_check_branch
    %436 = sbr.rel (0) target = $region25
  $region24: #{relunet_forward.1} parent=0 // pred_region
    _
  $region25: #{relunet_forward.1} parent=0 // pred_fallthru
    _
  // Predicated region
  $region26: #{relunet_forward.1} parent=0 // pred_check
    _
  $region27: #{relunet_forward.1} parent=0 // pred_check_branch
    %438 = sbr.rel (0) target = $region29
  $region28: #{relunet_forward.1} parent=0 // pred_region
    _
  $region29: #{relunet_forward.1} parent=0 // pred_fallthru
    _
  // Predicated region
  $region30: #{relunet_forward.1} parent=0 // pred_check
    _
  $region31: #{relunet_forward.1} parent=0 // pred_check_branch
    %440 = sbr.rel (0) target = $region33
  $region32: #{relunet_forward.1} parent=0 // pred_region
    _
  $region33: #{relunet_forward.1} parent=0 // pred_fallthru
    _
  // Predicated region
  $region34: #{relunet_forward.1} parent=0 // pred_check
    _
  $region35: #{relunet_forward.1} parent=0 // pred_check_branch
    %442 = sbr.rel (0) target = $region37
  $region36: #{relunet_forward.1} parent=0 // pred_region
    _
  $region37: #{relunet_forward.1} parent=0 // pred_fallthru
    _

</llo_original>
